<compile_context>
chip_gen: v7x
topology: tpu7x:2x2x1
jax: 0.10.0
libtpu: 0.0.40
codegen_flags: <defaults>
</compile_context>

<pallas_src>
import jax
import jax.numpy as jnp
from jax.experimental import pallas as pl
from jax.experimental.pallas import tpu as pltpu


def _round_up(n, m):
    return ((n + m - 1) // m) * m


def _mlp_kernel(x_ref,
                w1_ref, sh1_ref,                      # fc1 with BN1 folded in
                w2_ref, b2_ref, s2_ref, t2_ref,       # fc2 (feature is pre-BN) + BN2 vecs
                w3_ref, sh3_ref,                      # fc3 with BN3 folded in
                w4_ref, b4_ref,
                w5_ref, b5_ref,                       # fc5, lane-padded columns
                out_ref, feat_ref):
    f32 = jnp.float32
    cdt = w1_ref.dtype                                # compute dtype (bf16) for MXU inputs
    x = x_ref[...].astype(cdt)                        # cast in-kernel (no wrapper round-trip)

    # fc1 (+BN1 folded) -> LeakyReLU -> Dropout (identity, eval mode)
    h = jnp.dot(x, w1_ref[...], preferred_element_type=f32) + sh1_ref[...]
    h = jnp.maximum(h, 0.01 * h)                      # LeakyReLU, f32 on the VPU
    h = h.astype(cdt)

    # fc2 -> feature (pre-BN, pre-ReLU) -- store as bf16 (dominant HBM writeback)
    feat = jnp.dot(h, w2_ref[...], preferred_element_type=f32) + b2_ref[...]
    feat_ref[...] = feat.astype(feat_ref.dtype)

    # BN2 -> ReLU -> fc3 (+BN3 folded)
    h = feat * s2_ref[...] + t2_ref[...]
    h = jnp.maximum(h, 0.0).astype(cdt)
    h = jnp.dot(h, w3_ref[...], preferred_element_type=f32) + sh3_ref[...]

    # ReLU -> fc4
    h = jnp.maximum(h, 0.0).astype(cdt)
    h = jnp.dot(h, w4_ref[...], preferred_element_type=f32) + b4_ref[...]

    # ReLU -> fc5 (lane-padded output slab)
    h = jnp.maximum(h, 0.0).astype(cdt)
    out = jnp.dot(h, w5_ref[...], preferred_element_type=f32) + b5_ref[...]
    out_ref[...] = out.astype(out_ref.dtype)


def prepare_params(params, bn_params, *, compute_dtype=jnp.bfloat16, eps=1e-5):
    """One-time fold/cast/pad of the weights (hoisted out of the per-call hot path)."""
    (w1, b1), (w2, b2), (w3, b3), (w4, b4), (w5, b5) = params
    (g1, be1, m1, v1), (g2, be2, m2, v2), (g3, be3, m3, v3) = bn_params
    out_size = int(w5.shape[1])

    def bn_fold(g, b, m, v):
        s = (g / jnp.sqrt(v + eps)).reshape(1, -1).astype(jnp.float32)
        t = (b - m * (g / jnp.sqrt(v + eps))).reshape(1, -1).astype(jnp.float32)
        return s, t

    s1, t1 = bn_fold(g1, be1, m1, v1)
    s2, t2 = bn_fold(g2, be2, m2, v2)
    s3, t3 = bn_fold(g3, be3, m3, v3)

    # Fold BN1 into fc1 and BN3 into fc3:  y*s + t == x @ (w*s) + (b*s + t)
    w1f = (w1.astype(jnp.float32) * s1).astype(compute_dtype)
    sh1 = (b1.reshape(1, -1) * s1 + t1).astype(jnp.float32)
    w3f = (w3.astype(jnp.float32) * s3).astype(compute_dtype)
    sh3 = (b3.reshape(1, -1) * s3 + t3).astype(jnp.float32)

    # Lane-dense fc5 output: pad columns with zeros up to a multiple of 128.
    out_pad = _round_up(max(out_size, 128), 128)
    w5p = jnp.pad(w5, ((0, 0), (0, out_pad - out_size))).astype(compute_dtype)
    b5p = jnp.pad(b5.reshape(1, -1), ((0, 0), (0, out_pad - out_size))).astype(jnp.float32)

    return dict(
        w1=w1f, sh1=sh1,
        w2=w2.astype(compute_dtype), b2=b2.reshape(1, -1).astype(jnp.float32), s2=s2, t2=t2,
        w3=w3f, sh3=sh3,
        w4=w4.astype(compute_dtype), b4=b4.reshape(1, -1).astype(jnp.float32),
        w5=w5p, b5=b5p,
        out_size=out_size, out_pad=out_pad,
    )


def _pick_vmem_limit():
    # Generation-aware: ~3/4 of physical VMEM, capped at 112 MiB.
    # v7x (64 MiB)  -> 48 MiB ;  v5e/v6e (128 MiB) -> 96 MiB.
    try:
        cap = int(pltpu.get_tpu_info().vmem_capacity_bytes)
    except Exception:
        cap = 64 * 1024 * 1024
    return min((cap * 3) // 4, 112 * 1024 * 1024)


def _pick_tb(B, block_batch):
    if block_batch is not None:
        tb = _round_up(int(block_batch), 8)
    else:
        # Aim for >= 4 grid steps (pipelining / megacore), tb multiple of 8, cap at 128 rows.
        tb = min(128, _round_up(max((B + 3) // 4, 8), 8))
    return max(tb, 8)


def cmu_text_finetuning_forward(x, prepared, *, block_batch=None,
                                feat_dtype=jnp.bfloat16, out_dtype=jnp.float32):
    """Eval-mode forward. x: (B, input_size) float32. Returns (out, feature)."""
    B, D = x.shape
    out_size = prepared["out_size"]
    out_pad = prepared["out_pad"]
    D2 = prepared["w3"].shape[1]
    D4 = prepared["w4"].shape[1]

    tb = _pick_tb(B, block_batch)
    B_pad = _round_up(B, tb)
    grid = (B_pad // tb,)
    x_p = x if B_pad == B else jnp.pad(x, ((0, B_pad - B), (0, 0)))

    def const(a):
        # Constant block every grid step: no re-DMA, single-buffered to halve VMEM footprint.
        return pl.BlockSpec(a.shape, lambda i: (0, 0), pipeline_mode=pl.Buffered(1))

    p = prepared
    in_arrays = (x_p,
                 p["w1"], p["sh1"],
                 p["w2"], p["b2"], p["s2"], p["t2"],
                 p["w3"], p["sh3"],
                 p["w4"], p["b4"],
                 p["w5"], p["b5"])
    in_specs = [pl.BlockSpec((tb, D), lambda i: (i, 0))] + [const(a) for a in in_arrays[1:]]

    out_specs = [
        pl.BlockSpec((tb, out_pad), lambda i: (i, 0)),
        pl.BlockSpec((tb, D), lambda i: (i, 0)),
    ]
    out_shape = [
        jax.ShapeDtypeStruct((B_pad, out_pad), out_dtype),
        jax.ShapeDtypeStruct((B_pad, D), feat_dtype),
    ]

    # Advisory cost estimate (helps XLA schedule around the custom call).
    itemsize = jnp.dtype(p["w1"].dtype).itemsize
    flops = 2 * B_pad * (D * D + D * D + D * D2 + D2 * D4 + D4 * out_pad)
    w_bytes = itemsize * (D * D + D * D + D * D2 + D2 * D4 + D4 * out_pad)
    vec_bytes = 4 * (D + D2 + D4 + out_pad + 3 * D)
    io_bytes = (x_p.dtype.itemsize * B_pad * D
                + jnp.dtype(out_dtype).itemsize * B_pad * out_pad
                + jnp.dtype(feat_dtype).itemsize * B_pad * D)
    cost = pl.CostEstimate(flops=int(flops), transcendentals=0,
                           bytes_accessed=int(w_bytes + vec_bytes + io_bytes))

    out_full, feat_full = pl.pallas_call(
        _mlp_kernel,
        out_shape=out_shape,
        grid_spec=pltpu.PrefetchScalarGridSpec(
            num_scalar_prefetch=0,
            grid=grid,
            in_specs=in_specs,
            out_specs=out_specs,
        ),
        compiler_params=pltpu.CompilerParams(
            dimension_semantics=("parallel",),
            vmem_limit_bytes=_pick_vmem_limit(),
        ),
        cost_estimate=cost,
    )(*in_arrays)

    # Slice away batch padding and the lane padding of the final layer.
    return out_full[:B, :out_size], feat_full[:B, :]


def init_params(key, input_size, output_size):
    """PyTorch-Linear-style init. Weights stored as (in_features, out_features)."""
    sizes = [
        (input_size, input_size),
        (input_size, input_size),
        (input_size, input_size // 2),
        (input_size // 2, input_size // 4),
        (input_size // 4, output_size),
    ]
    params = []
    for (fan_in, fan_out) in sizes:
        key, kw, kb = jax.random.split(key, 3)
        bound = 1.0 / (fan_in ** 0.5)
        w = jax.random.uniform(kw, (fan_in, fan_out), jnp.float32, -bound, bound)
        b = jax.random.uniform(kb, (fan_out,), jnp.float32, -bound, bound)
        params.append((w, b))
    return params


def init_bn_params(key, input_size):
    """Non-trivial eval-mode BatchNorm params (gamma, beta, running_mean, running_var)."""
    dims = [input_size, input_size, input_size // 2]
    bn = []
    for d in dims:
        key, kg, kb, km, kv = jax.random.split(key, 5)
        gamma = jax.random.uniform(kg, (d,), jnp.float32, 0.5, 1.5)
        beta = jax.random.uniform(kb, (d,), jnp.float32, -0.5, 0.5)
        mean = 0.1 * jax.random.normal(km, (d,), jnp.float32)
        var = jax.random.uniform(kv, (d,), jnp.float32, 0.5, 1.5)
        bn.append((gamma, beta, mean, var))
    return bn


def reference_forward(x, params, bn_params, compute_dtype=jnp.bfloat16, eps=1e-5):
    """Pure-JAX reference of the eval-mode PyTorch forward, matching kernel precision."""
    (w1, b1), (w2, b2), (w3, b3), (w4, b4), (w5, b5) = params
    (g1, be1, m1, v1), (g2, be2, m2, v2), (g3, be3, m3, v3) = bn_params

    def lin(h, w, b):
        return jnp.dot(h.astype(compute_dtype), w.astype(compute_dtype),
                       preferred_element_type=jnp.float32) + b.reshape(1, -1)

    def bn(h, g, b, m, v):
        return (h - m) / jnp.sqrt(v + eps) * g + b

    h = lin(x, w1, b1)
    h = bn(h, g1, be1, m1, v1)
    h = jnp.where(h > 0, h, 0.01 * h)          # LeakyReLU; Dropout identity in eval mode
    feat = lin(h, w2, b2)
    h = jnp.maximum(bn(feat, g2, be2, m2, v2), 0.0)
    h = lin(h, w3, b3)
    h = jnp.maximum(bn(h, g3, be3, m3, v3), 0.0)
    h = lin(h, w4, b4)
    h = jnp.maximum(h, 0.0)
    out = lin(h, w5, b5)
    return out, feat


if __name__ == "__main__":
    key = jax.random.PRNGKey(0)
    k_in, k_p, k_bn = jax.random.split(key, 3)

    batch = 64
    input_size = 128        # fc3 -> 64, fc4 -> 32
    output_size = 16

    x = jax.random.normal(k_in, (batch, input_size), jnp.float32)
    params = init_params(k_p, input_size, output_size)
    bn_params = init_bn_params(k_bn, input_size)

    prepared = prepare_params(params, bn_params)
    out, feat = cmu_text_finetuning_forward(x, prepared)   # grid has 4 steps (tb=16)
    out = jax.block_until_ready(out)
    feat = jax.block_until_ready(feat)

    ref_out, ref_feat = reference_forward(x, params, bn_params)

    assert out.shape == (batch, output_size), out.shape
    assert feat.shape == (batch, input_size), feat.shape
    assert jnp.allclose(out.astype(jnp.float32), ref_out, atol=3e-2, rtol=3e-2), \
        float(jnp.max(jnp.abs(out.astype(jnp.float32) - ref_out)))
    assert jnp.allclose(feat.astype(jnp.float32), ref_feat, atol=3e-2, rtol=3e-2), \
        float(jnp.max(jnp.abs(feat.astype(jnp.float32) - ref_feat)))

    print("KERNEL_OK")
</pallas_src>

<mosaic_0001>
module attributes {stable_mosaic.version = 11 : i64} {
  func.func @_mlp_kernel(%arg0: i32, %arg1: memref<16x128xf32, #tpu.memory_space<vmem>>, %arg2: memref<128x128xbf16, #tpu.memory_space<vmem>>, %arg3: memref<1x128xf32, #tpu.memory_space<vmem>>, %arg4: memref<128x128xbf16, #tpu.memory_space<vmem>>, %arg5: memref<1x128xf32, #tpu.memory_space<vmem>>, %arg6: memref<1x128xf32, #tpu.memory_space<vmem>>, %arg7: memref<1x128xf32, #tpu.memory_space<vmem>>, %arg8: memref<128x64xbf16, #tpu.memory_space<vmem>>, %arg9: memref<1x64xf32, #tpu.memory_space<vmem>>, %arg10: memref<64x32xbf16, #tpu.memory_space<vmem>>, %arg11: memref<1x32xf32, #tpu.memory_space<vmem>>, %arg12: memref<32x128xbf16, #tpu.memory_space<vmem>>, %arg13: memref<1x128xf32, #tpu.memory_space<vmem>>, %arg14: memref<16x128xf32, #tpu.memory_space<vmem>>, %arg15: memref<16x128xbf16, #tpu.memory_space<vmem>>) attributes {dimension_semantics = [#tpu.dimension_semantics<parallel>], iteration_bounds = array<i64: 4>, scalar_prefetch = 0 : i64, scratch_operands = 0 : i64, tpu.core_type = #tpu.core_type<tc>, window_params = [{transform_indices = @transform_0, window_bounds = array<i64: 16, 128>}, {pipeline_mode = #tpu.pipeline_mode<synchronous>, transform_indices = @transform_1, window_bounds = array<i64: 128, 128>}, {pipeline_mode = #tpu.pipeline_mode<synchronous>, transform_indices = @transform_2, window_bounds = array<i64: 1, 128>}, {pipeline_mode = #tpu.pipeline_mode<synchronous>, transform_indices = @transform_3, window_bounds = array<i64: 128, 128>}, {pipeline_mode = #tpu.pipeline_mode<synchronous>, transform_indices = @transform_4, window_bounds = array<i64: 1, 128>}, {pipeline_mode = #tpu.pipeline_mode<synchronous>, transform_indices = @transform_5, window_bounds = array<i64: 1, 128>}, {pipeline_mode = #tpu.pipeline_mode<synchronous>, transform_indices = @transform_6, window_bounds = array<i64: 1, 128>}, {pipeline_mode = #tpu.pipeline_mode<synchronous>, transform_indices = @transform_7, window_bounds = array<i64: 128, 64>}, {pipeline_mode = #tpu.pipeline_mode<synchronous>, transform_indices = @transform_8, window_bounds = array<i64: 1, 64>}, {pipeline_mode = #tpu.pipeline_mode<synchronous>, transform_indices = @transform_9, window_bounds = array<i64: 64, 32>}, {pipeline_mode = #tpu.pipeline_mode<synchronous>, transform_indices = @transform_10, window_bounds = array<i64: 1, 32>}, {pipeline_mode = #tpu.pipeline_mode<synchronous>, transform_indices = @transform_11, window_bounds = array<i64: 32, 128>}, {pipeline_mode = #tpu.pipeline_mode<synchronous>, transform_indices = @transform_12, window_bounds = array<i64: 1, 128>}, {transform_indices = @transform_13, window_bounds = array<i64: 16, 128>}, {transform_indices = @transform_14, window_bounds = array<i64: 16, 128>}]} {
    %c0 = arith.constant 0 : index
    %c0_0 = arith.constant 0 : index
    %0 = vector.load %arg1[%c0, %c0_0] : memref<16x128xf32, #tpu.memory_space<vmem>>, vector<16x128xf32>
    %1 = arith.truncf %0 : vector<16x128xf32> to vector<16x128xbf16>
    %c0_1 = arith.constant 0 : index
    %c0_2 = arith.constant 0 : index
    %2 = vector.load %arg2[%c0_1, %c0_2] : memref<128x128xbf16, #tpu.memory_space<vmem>>, vector<128x128xbf16>
    %cst = arith.constant dense<0.000000e+00> : vector<16x128xf32>
    %3 = tpu.matmul %1, %2, %cst {dimension_numbers = #tpu.dot_dimension_numbers<[1], [0], [0], [1], [0, 0, 1, 1], [], []>} : vector<16x128xbf16>, vector<128x128xbf16>, vector<16x128xf32> -> vector<16x128xf32>
    %c0_3 = arith.constant 0 : index
    %c0_4 = arith.constant 0 : index
    %4 = vector.load %arg3[%c0_3, %c0_4] : memref<1x128xf32, #tpu.memory_space<vmem>>, vector<1x128xf32>
    %5 = vector.broadcast %4 : vector<1x128xf32> to vector<16x128xf32>
    %6 = arith.addf %3, %5 : vector<16x128xf32>
    %cst_5 = arith.constant 0.00999999977 : f32
    %7 = vector.broadcast %cst_5 : f32 to vector<16x128xf32>
    %8 = arith.mulf %7, %6 : vector<16x128xf32>
    %9 = arith.maximumf %6, %8 : vector<16x128xf32>
    %10 = arith.truncf %9 : vector<16x128xf32> to vector<16x128xbf16>
    %c0_6 = arith.constant 0 : index
    %c0_7 = arith.constant 0 : index
    %11 = vector.load %arg4[%c0_6, %c0_7] : memref<128x128xbf16, #tpu.memory_space<vmem>>, vector<128x128xbf16>
    %cst_8 = arith.constant dense<0.000000e+00> : vector<16x128xf32>
    %12 = tpu.matmul %10, %11, %cst_8 {dimension_numbers = #tpu.dot_dimension_numbers<[1], [0], [0], [1], [0, 0, 1, 1], [], []>} : vector<16x128xbf16>, vector<128x128xbf16>, vector<16x128xf32> -> vector<16x128xf32>
    %c0_9 = arith.constant 0 : index
    %c0_10 = arith.constant 0 : index
    %13 = vector.load %arg5[%c0_9, %c0_10] : memref<1x128xf32, #tpu.memory_space<vmem>>, vector<1x128xf32>
    %14 = vector.broadcast %13 : vector<1x128xf32> to vector<16x128xf32>
    %15 = arith.addf %12, %14 : vector<16x128xf32>
    %16 = arith.truncf %15 : vector<16x128xf32> to vector<16x128xbf16>
    %c0_11 = arith.constant 0 : index
    %c0_12 = arith.constant 0 : index
    %17 = vector.load %arg15[%c0_11, %c0_12] : memref<16x128xbf16, #tpu.memory_space<vmem>>, vector<16x128xbf16>
    tpu.vector_store %arg15[%c0_11, %c0_12], %16 {strides = array<i32>} : memref<16x128xbf16, #tpu.memory_space<vmem>>, vector<16x128xbf16>,
    %c0_13 = arith.constant 0 : index
    %c0_14 = arith.constant 0 : index
    %18 = vector.load %arg6[%c0_13, %c0_14] : memref<1x128xf32, #tpu.memory_space<vmem>>, vector<1x128xf32>
    %19 = vector.broadcast %18 : vector<1x128xf32> to vector<16x128xf32>
    %20 = arith.mulf %15, %19 : vector<16x128xf32>
    %c0_15 = arith.constant 0 : index
    %c0_16 = arith.constant 0 : index
    %21 = vector.load %arg7[%c0_15, %c0_16] : memref<1x128xf32, #tpu.memory_space<vmem>>, vector<1x128xf32>
    %22 = vector.broadcast %21 : vector<1x128xf32> to vector<16x128xf32>
    %23 = arith.addf %20, %22 : vector<16x128xf32>
    %cst_17 = arith.constant 0.000000e+00 : f32
    %24 = vector.broadcast %cst_17 : f32 to vector<16x128xf32>
    %25 = arith.maximumf %23, %24 : vector<16x128xf32>
    %26 = arith.truncf %25 : vector<16x128xf32> to vector<16x128xbf16>
    %c0_18 = arith.constant 0 : index
    %c0_19 = arith.constant 0 : index
    %27 = vector.load %arg8[%c0_18, %c0_19] : memref<128x64xbf16, #tpu.memory_space<vmem>>, vector<128x64xbf16>
    %cst_20 = arith.constant dense<0.000000e+00> : vector<16x64xf32>
    %28 = tpu.matmul %26, %27, %cst_20 {dimension_numbers = #tpu.dot_dimension_numbers<[1], [0], [0], [1], [0, 0, 1, 1], [], []>} : vector<16x128xbf16>, vector<128x64xbf16>, vector<16x64xf32> -> vector<16x64xf32>
    %c0_21 = arith.constant 0 : index
    %c0_22 = arith.constant 0 : index
    %29 = vector.load %arg9[%c0_21, %c0_22] : memref<1x64xf32, #tpu.memory_space<vmem>>, vector<1x64xf32>
    %30 = vector.broadcast %29 : vector<1x64xf32> to vector<16x64xf32>
    %31 = arith.addf %28, %30 : vector<16x64xf32>
    %cst_23 = arith.constant 0.000000e+00 : f32
    %32 = vector.broadcast %cst_23 : f32 to vector<16x64xf32>
    %33 = arith.maximumf %31, %32 : vector<16x64xf32>
    %34 = arith.truncf %33 : vector<16x64xf32> to vector<16x64xbf16>
    %c0_24 = arith.constant 0 : index
    %c0_25 = arith.constant 0 : index
    %35 = vector.load %arg10[%c0_24, %c0_25] : memref<64x32xbf16, #tpu.memory_space<vmem>>, vector<64x32xbf16>
    %cst_26 = arith.constant dense<0.000000e+00> : vector<16x32xf32>
    %36 = tpu.matmul %34, %35, %cst_26 {dimension_numbers = #tpu.dot_dimension_numbers<[1], [0], [0], [1], [0, 0, 1, 1], [], []>} : vector<16x64xbf16>, vector<64x32xbf16>, vector<16x32xf32> -> vector<16x32xf32>
    %c0_27 = arith.constant 0 : index
    %c0_28 = arith.constant 0 : index
    %37 = vector.load %arg11[%c0_27, %c0_28] : memref<1x32xf32, #tpu.memory_space<vmem>>, vector<1x32xf32>
    %38 = vector.broadcast %37 : vector<1x32xf32> to vector<16x32xf32>
    %39 = arith.addf %36, %38 : vector<16x32xf32>
    %cst_29 = arith.constant 0.000000e+00 : f32
    %40 = vector.broadcast %cst_29 : f32 to vector<16x32xf32>
    %41 = arith.maximumf %39, %40 : vector<16x32xf32>
    %42 = arith.truncf %41 : vector<16x32xf32> to vector<16x32xbf16>
    %c0_30 = arith.constant 0 : index
    %c0_31 = arith.constant 0 : index
    %43 = vector.load %arg12[%c0_30, %c0_31] : memref<32x128xbf16, #tpu.memory_space<vmem>>, vector<32x128xbf16>
    %cst_32 = arith.constant dense<0.000000e+00> : vector<16x128xf32>
    %44 = tpu.matmul %42, %43, %cst_32 {dimension_numbers = #tpu.dot_dimension_numbers<[1], [0], [0], [1], [0, 0, 1, 1], [], []>} : vector<16x32xbf16>, vector<32x128xbf16>, vector<16x128xf32> -> vector<16x128xf32>
    %c0_33 = arith.constant 0 : index
    %c0_34 = arith.constant 0 : index
    %45 = vector.load %arg13[%c0_33, %c0_34] : memref<1x128xf32, #tpu.memory_space<vmem>>, vector<1x128xf32>
    %46 = vector.broadcast %45 : vector<1x128xf32> to vector<16x128xf32>
    %47 = arith.addf %44, %46 : vector<16x128xf32>
    %c0_35 = arith.constant 0 : index
    %c0_36 = arith.constant 0 : index
    %48 = vector.load %arg14[%c0_35, %c0_36] : memref<16x128xf32, #tpu.memory_space<vmem>>, vector<16x128xf32>
    tpu.vector_store %arg14[%c0_35, %c0_36], %47 {strides = array<i32>} : memref<16x128xf32, #tpu.memory_space<vmem>>, vector<16x128xf32>,
    return
  }
  func.func @transform_0(%arg0: i32) -> (i32, i32) {
    %c0_i32 = arith.constant 0 : i32
    %c0_i32_0 = arith.constant 0 : i32
    return %arg0, %c0_i32 : i32, i32
  }
  func.func @transform_1(%arg0: i32) -> (i32, i32) {
    %c0_i32 = arith.constant 0 : i32
    %c0_i32_0 = arith.constant 0 : i32
    %c0_i32_1 = arith.constant 0 : i32
    return %c0_i32, %c0_i32_0 : i32, i32
  }
  func.func @transform_2(%arg0: i32) -> (i32, i32) {
    %c0_i32 = arith.constant 0 : i32
    %c0_i32_0 = arith.constant 0 : i32
    %c0_i32_1 = arith.constant 0 : i32
    return %c0_i32, %c0_i32_0 : i32, i32
  }
  func.func @transform_3(%arg0: i32) -> (i32, i32) {
    %c0_i32 = arith.constant 0 : i32
    %c0_i32_0 = arith.constant 0 : i32
    %c0_i32_1 = arith.constant 0 : i32
    return %c0_i32, %c0_i32_0 : i32, i32
  }
  func.func @transform_4(%arg0: i32) -> (i32, i32) {
    %c0_i32 = arith.constant 0 : i32
    %c0_i32_0 = arith.constant 0 : i32
    %c0_i32_1 = arith.constant 0 : i32
    return %c0_i32, %c0_i32_0 : i32, i32
  }
  func.func @transform_5(%arg0: i32) -> (i32, i32) {
    %c0_i32 = arith.constant 0 : i32
    %c0_i32_0 = arith.constant 0 : i32
    %c0_i32_1 = arith.constant 0 : i32
    return %c0_i32, %c0_i32_0 : i32, i32
  }
  func.func @transform_6(%arg0: i32) -> (i32, i32) {
    %c0_i32 = arith.constant 0 : i32
    %c0_i32_0 = arith.constant 0 : i32
    %c0_i32_1 = arith.constant 0 : i32
    return %c0_i32, %c0_i32_0 : i32, i32
  }
  func.func @transform_7(%arg0: i32) -> (i32, i32) {
    %c0_i32 = arith.constant 0 : i32
    %c0_i32_0 = arith.constant 0 : i32
    %c0_i32_1 = arith.constant 0 : i32
    return %c0_i32, %c0_i32_0 : i32, i32
  }
  func.func @transform_8(%arg0: i32) -> (i32, i32) {
    %c0_i32 = arith.constant 0 : i32
    %c0_i32_0 = arith.constant 0 : i32
    %c0_i32_1 = arith.constant 0 : i32
    return %c0_i32, %c0_i32_0 : i32, i32
  }
  func.func @transform_9(%arg0: i32) -> (i32, i32) {
    %c0_i32 = arith.constant 0 : i32
    %c0_i32_0 = arith.constant 0 : i32
    %c0_i32_1 = arith.constant 0 : i32
    return %c0_i32, %c0_i32_0 : i32, i32
  }
  func.func @transform_10(%arg0: i32) -> (i32, i32) {
    %c0_i32 = arith.constant 0 : i32
    %c0_i32_0 = arith.constant 0 : i32
    %c0_i32_1 = arith.constant 0 : i32
    return %c0_i32, %c0_i32_0 : i32, i32
  }
  func.func @transform_11(%arg0: i32) -> (i32, i32) {
    %c0_i32 = arith.constant 0 : i32
    %c0_i32_0 = arith.constant 0 : i32
    %c0_i32_1 = arith.constant 0 : i32
    return %c0_i32, %c0_i32_0 : i32, i32
  }
  func.func @transform_12(%arg0: i32) -> (i32, i32) {
    %c0_i32 = arith.constant 0 : i32
    %c0_i32_0 = arith.constant 0 : i32
    %c0_i32_1 = arith.constant 0 : i32
    return %c0_i32, %c0_i32_0 : i32, i32
  }
  func.func @transform_13(%arg0: i32) -> (i32, i32) {
    %c0_i32 = arith.constant 0 : i32
    %c0_i32_0 = arith.constant 0 : i32
    return %arg0, %c0_i32 : i32, i32
  }
  func.func @transform_14(%arg0: i32) -> (i32, i32) {
    %c0_i32 = arith.constant 0 : i32
    %c0_i32_0 = arith.constant 0 : i32
    return %arg0, %c0_i32 : i32, i32
  }
}

</mosaic_0001>

<llo_original>
// kernel: tpu_custom_call.1
$region0: #{tpu_custom_call.1}
  #allocation0 [shape = 'u32[]', space=smem, size = 0x4, offset = 0x4, fixed_abs, tag = 'smem constant byte address 0x4 - core index']
  #allocation1 [shape = 'u32[144,128]{1,0:T(1,128)}', space=vmem, size = 0x12000, scoped, tag = 'internal scratch']
  %s0 = inlined_call_operand.vmem [shape: f32[64,128], index: 0, kind: input, shape index: {}]
  %s1 = inlined_call_operand.vmem [shape: bf16[128,128], index: 1, kind: input, shape index: {}]
  %s2 = inlined_call_operand.vmem [shape: f32[1,128], index: 2, kind: input, shape index: {}]
  %s3 = inlined_call_operand.hbm [shape: bf16[128,128], index: 3, kind: input, shape index: {}]
  %s4 = inlined_call_operand.vmem [shape: f32[1,128], index: 4, kind: input, shape index: {}]
  %s5 = inlined_call_operand.hbm [shape: f32[1,128], index: 5, kind: input, shape index: {}]
  %s6 = inlined_call_operand.hbm [shape: f32[1,128], index: 6, kind: input, shape index: {}]
  %s7 = inlined_call_operand.vmem [shape: bf16[128,64], index: 7, kind: input, shape index: {}]
  %s8 = inlined_call_operand.hbm [shape: f32[1,64], index: 8, kind: input, shape index: {}]
  %s9 = inlined_call_operand.vmem [shape: bf16[64,32], index: 9, kind: input, shape index: {}]
  %s10 = inlined_call_operand.vmem [shape: f32[1,32], index: 10, kind: input, shape index: {}]
  %s11 = inlined_call_operand.hbm [shape: bf16[32,128], index: 11, kind: input, shape index: {}]
  %s12 = inlined_call_operand.vmem [shape: f32[1,128], index: 12, kind: input, shape index: {}]
  %s13 = inlined_call_operand.hbm [shape: f32[64,128], index: 13, kind: output, shape index: {0}]
  %s14 = inlined_call_operand.hbm [shape: bf16[64,128], index: 14, kind: output, shape index: {1}]
  %15 = xla_tuple %s13, %s14
  %s16 = sld [smem:[#allocation0]]
  $region113: #{tpu_custom_call.1} parent=0
    _
  %s18 = ssub.s32 1, %s16
  %s19 = scalar_select 0, %s18, %s16
  $region1: #{tpu_custom_call.1} parent=0
    #allocation2 [shape = 'u8[32768]{0}', space=vmem, size = 0x8000, scoped, tag = 'input window, operand 3, single buffered']
    #allocation3 [shape = 's32[2]{0}', space=sflag, size = 0x8, scoped, tag = 'scoped memory for tpu_custom_call.1']
    #allocation4 [shape = 's32[2]{0}', space=sflag, size = 0x8, scoped, tag = 'scoped memory for tpu_custom_call.1']
    #allocation5 [shape = 'u8[512]{0}', space=vmem, size = 0x400, scoped, tag = 'input window, operand 5, single buffered']
    #allocation6 [shape = 's32[1]{0}', space=sflag, size = 0x4, scoped, tag = 'scoped memory for tpu_custom_call.1']
    #allocation7 [shape = 'u8[512]{0}', space=vmem, size = 0x400, scoped, tag = 'input window, operand 6, single buffered']
    #allocation8 [shape = 'u8[512]{0}', space=vmem, size = 0x400, scoped, tag = 'input window, operand 8, single buffered']
    #allocation9 [shape = 's32[1]{0}', space=sflag, size = 0x4, scoped, tag = 'scoped memory for tpu_custom_call.1']
    #allocation10 [shape = 'u8[8192]{0}', space=vmem, size = 0x2000, scoped, tag = 'input window, operand 11, single buffered']
    #allocation11 [shape = 'u8[16384]{0}', space=vmem, size = 0x4000, scoped, tag = 'output window, operand 0']
    #allocation12 [shape = 'u8[8192]{0}', space=vmem, size = 0x2000, scoped, tag = 'output window, operand 1']
    #allocation13 [shape = 's32[2]{0}', space=sflag, size = 0x8, scoped, tag = 'scoped memory for tpu_custom_call.1']
    %20 = vsyncpa [#allocation3], 0
    %21 = vsyncpa [#allocation6], 0
    %22 = vsyncpa [#allocation9], 0
    %23 = vsyncpa [#allocation4], 0
    %s24 = scalar_lea.sflag [#allocation4], 1
    %25 = vsyncpa %s24, 0
    %26 = vsyncpa [#allocation13], 0
    %s27 = scalar_lea.sflag [#allocation13], 1
    %28 = vsyncpa %s27, 0
    loop: start=0, step=1, limit=6
    $region2: #{tpu_custom_call.1} parent=1 // loop_pre_header
      _
    $region3: #{tpu_custom_call.1} parent=1 // loop_header
      %s30 = sphi 0, %s34
      %p31 = scmp.ge.s32.totalorder %s30, 6
      %s40 = sphi 0, %s42
      %s43 = sphi 0, %s40
      %s44 = sphi 0, %s43
      %s60 = sphi 0, %s44
      %s64 = sphi 0, %s64
      %s66 = sphi 0, %s64
      %s67 = sphi 0, %s66
      %s81 = sphi 0, %s67
      %s85 = sphi 0, %s85
      %s87 = sphi 0, %s85
      %s88 = sphi 0, %s87
      %s102 = sphi 0, %s88
      %s106 = sphi 0, %s106
      %s108 = sphi 0, %s106
      %s109 = sphi 0, %s108
      %s123 = sphi 0, %s109
      %s127 = sphi 0, %s127
      %s129 = sphi 0, %s127
      %s130 = sphi 0, %s129
      %s144 = sphi 0, %s130
      %s148 = sphi 0, %s148
      %s150 = sphi 0, %s148
      %s151 = sphi 0, %s150
      %s165 = sphi 0, %s151
      %s169 = sphi 0, %s169
      %s171 = sphi 0, %s169
      %s172 = sphi 0, %s171
      %s186 = sphi 0, %s172
      %s190 = sphi 0, %s190
      %s192 = sphi 0, %s190
      %s193 = sphi 0, %s192
      %s207 = sphi 0, %s193
      %s211 = sphi 0, %s211
      %s213 = sphi 0, %s211
      %s214 = sphi 0, %s213
      %s228 = sphi 0, %s214
      %s232 = sphi 0, %s232
      %s234 = sphi 0, %s232
      %s235 = sphi 0, %s234
      %s249 = sphi 0, %s235
      %s253 = sphi 0, %s253
      %s255 = sphi 0, %s253
      %s256 = sphi 0, %s255
      %s270 = sphi 0, %s256
      %s274 = sphi 0, %s274
      %s276 = sphi 0, %s274
      %s277 = sphi 0, %s276
      %s291 = sphi 0, %s277
      %s295 = sphi 0, %s295
      %s297 = sphi 0, %s295
      %s298 = sphi 0, %s297
      %s312 = sphi 0, %s298
      %s318 = sphi 0, %s320
      %s321 = sphi 0, %s318
      %s322 = sphi 0, %s321
      %s338 = sphi 0, %s322
      %s344 = sphi 0, %s346
      %s347 = sphi 0, %s344
      %s348 = sphi 0, %s347
      %s364 = sphi 0, %s348
    $region4: #{tpu_custom_call.1} parent=1 // loop_header_branch
      %33 = sbr.rel (%p31) target = $region8
    $region5: #{tpu_custom_call.1} parent=1 // loop_body
      %s35 = ssub.s32 %s30, 1
      %s36 = ssub.s32 %s30, 2
      %s37 = sadd.s32 %s30, 1
      %s38 = ssub.s32 %s30, %s37
      %p39 = scmp.eq.s32.totalorder %s38, 0
      %s41 = sadd.s32 %s40, 1
      %s42 = scalar_select %p39, %s40, %s41
      %p45 = pneg %p39
      %p46 = scmp.eq.s32.totalorder %s30, 3
      %p47 = por %p45, %p46
      %p48 = scmp.ne.s32.totalorder %s40, %s43
      %p49 = scmp.eq.s32.totalorder %s30, 0
      %p50 = por %p48, %p49
      %p51 = scmp.ne.s32.totalorder %s40, %s43
      %p52 = scmp.eq.s32.totalorder %s35, 3
      %p53 = por %p51, %p52
      %p54 = scmp.ne.s32.totalorder %s43, %s44
      %p55 = scmp.eq.s32.totalorder %s35, 0
      %p56 = por %p54, %p55
      %p57 = scmp.ne.s32.totalorder %s43, %s44
      %p58 = scmp.eq.s32.totalorder %s36, 3
      %p59 = por %p57, %p58
      %p61 = scmp.ne.s32.totalorder %s44, %s60
      %p62 = scmp.eq.s32.totalorder %s36, 0
      %p63 = por %p61, %p62
      %s65 = sadd.s32 %s64, 1
      %p68 = scmp.eq.s32.totalorder %s30, 3
      %p69 = scmp.ne.s32.totalorder %s64, %s66
      %p70 = scmp.eq.s32.totalorder %s30, 0
      %p71 = por %p69, %p70
      %p72 = scmp.ne.s32.totalorder %s64, %s66
      %p73 = scmp.eq.s32.totalorder %s35, 3
      %p74 = por %p72, %p73
      %p75 = scmp.ne.s32.totalorder %s66, %s67
      %p76 = scmp.eq.s32.totalorder %s35, 0
      %p77 = por %p75, %p76
      %p78 = scmp.ne.s32.totalorder %s66, %s67
      %p79 = scmp.eq.s32.totalorder %s36, 3
      %p80 = por %p78, %p79
      %p82 = scmp.ne.s32.totalorder %s67, %s81
      %p83 = scmp.eq.s32.totalorder %s36, 0
      %p84 = por %p82, %p83
      %s86 = sadd.s32 %s85, 1
      %p89 = scmp.eq.s32.totalorder %s30, 3
      %p90 = scmp.ne.s32.totalorder %s85, %s87
      %p91 = scmp.eq.s32.totalorder %s30, 0
      %p92 = por %p90, %p91
      %p93 = scmp.ne.s32.totalorder %s85, %s87
      %p94 = scmp.eq.s32.totalorder %s35, 3
      %p95 = por %p93, %p94
      %p96 = scmp.ne.s32.totalorder %s87, %s88
      %p97 = scmp.eq.s32.totalorder %s35, 0
      %p98 = por %p96, %p97
      %p99 = scmp.ne.s32.totalorder %s87, %s88
      %p100 = scmp.eq.s32.totalorder %s36, 3
      %p101 = por %p99, %p100
      %p103 = scmp.ne.s32.totalorder %s88, %s102
      %p104 = scmp.eq.s32.totalorder %s36, 0
      %p105 = por %p103, %p104
      %s107 = sadd.s32 %s106, 1
      %p110 = scmp.eq.s32.totalorder %s30, 3
      %p111 = scmp.ne.s32.totalorder %s106, %s108
      %p112 = scmp.eq.s32.totalorder %s30, 0
      %p113 = por %p111, %p112
      %p114 = scmp.ne.s32.totalorder %s106, %s108
      %p115 = scmp.eq.s32.totalorder %s35, 3
      %p116 = por %p114, %p115
      %p117 = scmp.ne.s32.totalorder %s108, %s109
      %p118 = scmp.eq.s32.totalorder %s35, 0
      %p119 = por %p117, %p118
      %p120 = scmp.ne.s32.totalorder %s108, %s109
      %p121 = scmp.eq.s32.totalorder %s36, 3
      %p122 = por %p120, %p121
      %p124 = scmp.ne.s32.totalorder %s109, %s123
      %p125 = scmp.eq.s32.totalorder %s36, 0
      %p126 = por %p124, %p125
      %s128 = sadd.s32 %s127, 1
      %p131 = scmp.eq.s32.totalorder %s30, 3
      %p132 = scmp.ne.s32.totalorder %s127, %s129
      %p133 = scmp.eq.s32.totalorder %s30, 0
      %p134 = por %p132, %p133
      %p135 = scmp.ne.s32.totalorder %s127, %s129
      %p136 = scmp.eq.s32.totalorder %s35, 3
      %p137 = por %p135, %p136
      %p138 = scmp.ne.s32.totalorder %s129, %s130
      %p139 = scmp.eq.s32.totalorder %s35, 0
      %p140 = por %p138, %p139
      %p141 = scmp.ne.s32.totalorder %s129, %s130
      %p142 = scmp.eq.s32.totalorder %s36, 3
      %p143 = por %p141, %p142
      %p145 = scmp.ne.s32.totalorder %s130, %s144
      %p146 = scmp.eq.s32.totalorder %s36, 0
      %p147 = por %p145, %p146
      %s149 = sadd.s32 %s148, 1
      %p152 = scmp.eq.s32.totalorder %s30, 3
      %p153 = scmp.ne.s32.totalorder %s148, %s150
      %p154 = scmp.eq.s32.totalorder %s30, 0
      %p155 = por %p153, %p154
      %p156 = scmp.ne.s32.totalorder %s148, %s150
      %p157 = scmp.eq.s32.totalorder %s35, 3
      %p158 = por %p156, %p157
      %p159 = scmp.ne.s32.totalorder %s150, %s151
      %p160 = scmp.eq.s32.totalorder %s35, 0
      %p161 = por %p159, %p160
      %p162 = scmp.ne.s32.totalorder %s150, %s151
      %p163 = scmp.eq.s32.totalorder %s36, 3
      %p164 = por %p162, %p163
      %p166 = scmp.ne.s32.totalorder %s151, %s165
      %p167 = scmp.eq.s32.totalorder %s36, 0
      %p168 = por %p166, %p167
      %s170 = sadd.s32 %s169, 1
      %p173 = scmp.eq.s32.totalorder %s30, 3
      %p174 = scmp.ne.s32.totalorder %s169, %s171
      %p175 = scmp.eq.s32.totalorder %s30, 0
      %p176 = por %p174, %p175
      %p177 = scmp.ne.s32.totalorder %s169, %s171
      %p178 = scmp.eq.s32.totalorder %s35, 3
      %p179 = por %p177, %p178
      %p180 = scmp.ne.s32.totalorder %s171, %s172
      %p181 = scmp.eq.s32.totalorder %s35, 0
      %p182 = por %p180, %p181
      %p183 = scmp.ne.s32.totalorder %s171, %s172
      %p184 = scmp.eq.s32.totalorder %s36, 3
      %p185 = por %p183, %p184
      %p187 = scmp.ne.s32.totalorder %s172, %s186
      %p188 = scmp.eq.s32.totalorder %s36, 0
      %p189 = por %p187, %p188
      %s191 = sadd.s32 %s190, 1
      %p194 = scmp.eq.s32.totalorder %s30, 3
      %p195 = scmp.ne.s32.totalorder %s190, %s192
      %p196 = scmp.eq.s32.totalorder %s30, 0
      %p197 = por %p195, %p196
      %p198 = scmp.ne.s32.totalorder %s190, %s192
      %p199 = scmp.eq.s32.totalorder %s35, 3
      %p200 = por %p198, %p199
      %p201 = scmp.ne.s32.totalorder %s192, %s193
      %p202 = scmp.eq.s32.totalorder %s35, 0
      %p203 = por %p201, %p202
      %p204 = scmp.ne.s32.totalorder %s192, %s193
      %p205 = scmp.eq.s32.totalorder %s36, 3
      %p206 = por %p204, %p205
      %p208 = scmp.ne.s32.totalorder %s193, %s207
      %p209 = scmp.eq.s32.totalorder %s36, 0
      %p210 = por %p208, %p209
      %s212 = sadd.s32 %s211, 1
      %p215 = scmp.eq.s32.totalorder %s30, 3
      %p216 = scmp.ne.s32.totalorder %s211, %s213
      %p217 = scmp.eq.s32.totalorder %s30, 0
      %p218 = por %p216, %p217
      %p219 = scmp.ne.s32.totalorder %s211, %s213
      %p220 = scmp.eq.s32.totalorder %s35, 3
      %p221 = por %p219, %p220
      %p222 = scmp.ne.s32.totalorder %s213, %s214
      %p223 = scmp.eq.s32.totalorder %s35, 0
      %p224 = por %p222, %p223
      %p225 = scmp.ne.s32.totalorder %s213, %s214
      %p226 = scmp.eq.s32.totalorder %s36, 3
      %p227 = por %p225, %p226
      %p229 = scmp.ne.s32.totalorder %s214, %s228
      %p230 = scmp.eq.s32.totalorder %s36, 0
      %p231 = por %p229, %p230
      %s233 = sadd.s32 %s232, 1
      %p236 = scmp.eq.s32.totalorder %s30, 3
      %p237 = scmp.ne.s32.totalorder %s232, %s234
      %p238 = scmp.eq.s32.totalorder %s30, 0
      %p239 = por %p237, %p238
      %p240 = scmp.ne.s32.totalorder %s232, %s234
      %p241 = scmp.eq.s32.totalorder %s35, 3
      %p242 = por %p240, %p241
      %p243 = scmp.ne.s32.totalorder %s234, %s235
      %p244 = scmp.eq.s32.totalorder %s35, 0
      %p245 = por %p243, %p244
      %p246 = scmp.ne.s32.totalorder %s234, %s235
      %p247 = scmp.eq.s32.totalorder %s36, 3
      %p248 = por %p246, %p247
      %p250 = scmp.ne.s32.totalorder %s235, %s249
      %p251 = scmp.eq.s32.totalorder %s36, 0
      %p252 = por %p250, %p251
      %s254 = sadd.s32 %s253, 1
      %p257 = scmp.eq.s32.totalorder %s30, 3
      %p258 = scmp.ne.s32.totalorder %s253, %s255
      %p259 = scmp.eq.s32.totalorder %s30, 0
      %p260 = por %p258, %p259
      %p261 = scmp.ne.s32.totalorder %s253, %s255
      %p262 = scmp.eq.s32.totalorder %s35, 3
      %p263 = por %p261, %p262
      %p264 = scmp.ne.s32.totalorder %s255, %s256
      %p265 = scmp.eq.s32.totalorder %s35, 0
      %p266 = por %p264, %p265
      %p267 = scmp.ne.s32.totalorder %s255, %s256
      %p268 = scmp.eq.s32.totalorder %s36, 3
      %p269 = por %p267, %p268
      %p271 = scmp.ne.s32.totalorder %s256, %s270
      %p272 = scmp.eq.s32.totalorder %s36, 0
      %p273 = por %p271, %p272
      %s275 = sadd.s32 %s274, 1
      %p278 = scmp.eq.s32.totalorder %s30, 3
      %p279 = scmp.ne.s32.totalorder %s274, %s276
      %p280 = scmp.eq.s32.totalorder %s30, 0
      %p281 = por %p279, %p280
      %p282 = scmp.ne.s32.totalorder %s274, %s276
      %p283 = scmp.eq.s32.totalorder %s35, 3
      %p284 = por %p282, %p283
      %p285 = scmp.ne.s32.totalorder %s276, %s277
      %p286 = scmp.eq.s32.totalorder %s35, 0
      %p287 = por %p285, %p286
      %p288 = scmp.ne.s32.totalorder %s276, %s277
      %p289 = scmp.eq.s32.totalorder %s36, 3
      %p290 = por %p288, %p289
      %p292 = scmp.ne.s32.totalorder %s277, %s291
      %p293 = scmp.eq.s32.totalorder %s36, 0
      %p294 = por %p292, %p293
      %s296 = sadd.s32 %s295, 1
      %p299 = scmp.eq.s32.totalorder %s30, 3
      %p300 = scmp.ne.s32.totalorder %s295, %s297
      %p301 = scmp.eq.s32.totalorder %s30, 0
      %p302 = por %p300, %p301
      %p303 = scmp.ne.s32.totalorder %s295, %s297
      %p304 = scmp.eq.s32.totalorder %s35, 3
      %p305 = por %p303, %p304
      %p306 = scmp.ne.s32.totalorder %s297, %s298
      %p307 = scmp.eq.s32.totalorder %s35, 0
      %p308 = por %p306, %p307
      %p309 = scmp.ne.s32.totalorder %s297, %s298
      %p310 = scmp.eq.s32.totalorder %s36, 3
      %p311 = por %p309, %p310
      %p313 = scmp.ne.s32.totalorder %s298, %s312
      %p314 = scmp.eq.s32.totalorder %s36, 0
      %p315 = por %p313, %p314
      %s316 = ssub.s32 %s30, %s37
      %p317 = scmp.eq.s32.totalorder %s316, 0
      %s319 = sadd.s32 %s318, 1
      %s320 = scalar_select %p317, %s318, %s319
      %p323 = pneg %p317
      %p324 = scmp.eq.s32.totalorder %s30, 3
      %p325 = por %p323, %p324
      %p326 = scmp.ne.s32.totalorder %s318, %s321
      %p327 = scmp.eq.s32.totalorder %s30, 0
      %p328 = por %p326, %p327
      %p329 = scmp.ne.s32.totalorder %s318, %s321
      %p330 = scmp.eq.s32.totalorder %s35, 3
      %p331 = por %p329, %p330
      %p332 = scmp.ne.s32.totalorder %s321, %s322
      %p333 = scmp.eq.s32.totalorder %s35, 0
      %p334 = por %p332, %p333
      %p335 = scmp.ne.s32.totalorder %s321, %s322
      %p336 = scmp.eq.s32.totalorder %s36, 3
      %p337 = por %p335, %p336
      %p339 = scmp.ne.s32.totalorder %s322, %s338
      %p340 = scmp.eq.s32.totalorder %s36, 0
      %p341 = por %p339, %p340
      %s342 = ssub.s32 %s30, %s37
      %p343 = scmp.eq.s32.totalorder %s342, 0
      %s345 = sadd.s32 %s344, 1
      %s346 = scalar_select %p343, %s344, %s345
      %p349 = pneg %p343
      %p350 = scmp.eq.s32.totalorder %s30, 3
      %p351 = por %p349, %p350
      %p352 = scmp.ne.s32.totalorder %s344, %s347
      %p353 = scmp.eq.s32.totalorder %s30, 0
      %p354 = por %p352, %p353
      %p355 = scmp.ne.s32.totalorder %s344, %s347
      %p356 = scmp.eq.s32.totalorder %s35, 3
      %p357 = por %p355, %p356
      %p358 = scmp.ne.s32.totalorder %s347, %s348
      %p359 = scmp.eq.s32.totalorder %s35, 0
      %p360 = por %p358, %p359
      %p361 = scmp.ne.s32.totalorder %s347, %s348
      %p362 = scmp.eq.s32.totalorder %s36, 3
      %p363 = por %p361, %p362
      %p365 = scmp.ne.s32.totalorder %s348, %s364
      %p366 = scmp.eq.s32.totalorder %s36, 0
      %p367 = por %p365, %p366
      %p368 = scmp.le.s32.totalorder 1, %s30
      %p369 = scmp.lt.s32.totalorder %s30, 5
      %p370 = pnand %p368, %p369
      %p371 = pneg %p370
      // Predicated region
      $region9: #{tpu_custom_call.1} parent=5 // pred_check
        _
      $region10: #{tpu_custom_call.1} parent=5 // pred_check_branch
        %373 = sbr.rel (%p370) target = $region12
      $region11: #{tpu_custom_call.1} parent=5 // pred_region
        %s374 = ssub.s32 %s30, 1
        // Predicated region
        $region13: #{tpu_custom_call.1} parent=11 // pred_check
          %p375 = pneg %p77
        $region14: #{tpu_custom_call.1} parent=11 // pred_check_branch
          %377 = sbr.rel (%p375) target = $region16
        $region15: #{tpu_custom_call.1} parent=11 // pred_region
          _
        $region16: #{tpu_custom_call.1} parent=11 // pred_fallthru
          _
        // Predicated region
        $region17: #{tpu_custom_call.1} parent=11 // pred_check
          %p378 = pneg %p98
        $region18: #{tpu_custom_call.1} parent=11 // pred_check_branch
          %380 = sbr.rel (%p378) target = $region20
        $region19: #{tpu_custom_call.1} parent=11 // pred_region
          _
        $region20: #{tpu_custom_call.1} parent=11 // pred_fallthru
          _
        // Predicated region
        $region21: #{tpu_custom_call.1} parent=11 // pred_check
          %p381 = pneg %p119
        $region22: #{tpu_custom_call.1} parent=11 // pred_check_branch
          %383 = sbr.rel (%p381) target = $region24
        $region23: #{tpu_custom_call.1} parent=11 // pred_region
          %s385 = ssub.s32 1024, 1024
          %386 = vsyncadd [#allocation3], %s385
          %s387 = sshll.u32 [#allocation2], 4
          %s388 = int_to_ptr.vmem [resolvable:$true] %s387
          %393 = dma.hbm_to_vmem [thread:$0]  %s3, 1024, %s388, [#allocation3], 64, 64, 4
        $region24: #{tpu_custom_call.1} parent=11 // pred_fallthru
          _
        // Predicated region
        $region25: #{tpu_custom_call.1} parent=11 // pred_check
          %p394 = pneg %p140
        $region26: #{tpu_custom_call.1} parent=11 // pred_check_branch
          %396 = sbr.rel (%p394) target = $region28
        $region27: #{tpu_custom_call.1} parent=11 // pred_region
          _
        $region28: #{tpu_custom_call.1} parent=11 // pred_fallthru
          _
        // Predicated region
        $region29: #{tpu_custom_call.1} parent=11 // pred_check
          %p397 = pneg %p161
        $region30: #{tpu_custom_call.1} parent=11 // pred_check_branch
          %399 = sbr.rel (%p397) target = $region32
        $region31: #{tpu_custom_call.1} parent=11 // pred_region
          %s401 = ssub.s32 16, 16
          %402 = vsyncadd [#allocation6], %s401
          %s404 = sshll.u32 [#allocation5], 4
          %s405 = int_to_ptr.vmem [resolvable:$true] %s404
          %407 = dma.hbm_to_vmem [thread:$0]  %s5, 16, %s405, [#allocation6]
        $region32: #{tpu_custom_call.1} parent=11 // pred_fallthru
          _
        // Predicated region
        $region33: #{tpu_custom_call.1} parent=11 // pred_check
          %p408 = pneg %p182
        $region34: #{tpu_custom_call.1} parent=11 // pred_check_branch
          %410 = sbr.rel (%p408) target = $region36
        $region35: #{tpu_custom_call.1} parent=11 // pred_region
          %s412 = ssub.s32 16, 16
          %413 = vsyncadd [#allocation6], %s412
          %s415 = sshll.u32 [#allocation7], 4
          %s416 = int_to_ptr.vmem [resolvable:$true] %s415
          %418 = dma.hbm_to_vmem [thread:$0]  %s6, 16, %s416, [#allocation6]
        $region36: #{tpu_custom_call.1} parent=11 // pred_fallthru
          _
        // Predicated region
        $region37: #{tpu_custom_call.1} parent=11 // pred_check
          %p419 = pneg %p203
        $region38: #{tpu_custom_call.1} parent=11 // pred_check_branch
          %421 = sbr.rel (%p419) target = $region40
        $region39: #{tpu_custom_call.1} parent=11 // pred_region
          _
        $region40: #{tpu_custom_call.1} parent=11 // pred_fallthru
          _
        // Predicated region
        $region41: #{tpu_custom_call.1} parent=11 // pred_check
          %p422 = pneg %p224
        $region42: #{tpu_custom_call.1} parent=11 // pred_check_branch
          %424 = sbr.rel (%p422) target = $region44
        $region43: #{tpu_custom_call.1} parent=11 // pred_region
          %s426 = ssub.s32 16, 16
          %427 = vsyncadd [#allocation9], %s426
          %s429 = sshll.u32 [#allocation8], 4
          %s430 = int_to_ptr.vmem [resolvable:$true] %s429
          %432 = dma.hbm_to_vmem [thread:$0]  %s8, 16, %s430, [#allocation9]
        $region44: #{tpu_custom_call.1} parent=11 // pred_fallthru
          _
        // Predicated region
        $region45: #{tpu_custom_call.1} parent=11 // pred_check
          %p433 = pneg %p245
        $region46: #{tpu_custom_call.1} parent=11 // pred_check_branch
          %435 = sbr.rel (%p433) target = $region48
        $region47: #{tpu_custom_call.1} parent=11 // pred_region
          _
        $region48: #{tpu_custom_call.1} parent=11 // pred_fallthru
          _
        // Predicated region
        $region49: #{tpu_custom_call.1} parent=11 // pred_check
          %p436 = pneg %p266
        $region50: #{tpu_custom_call.1} parent=11 // pred_check_branch
          %438 = sbr.rel (%p436) target = $region52
        $region51: #{tpu_custom_call.1} parent=11 // pred_region
          _
        $region52: #{tpu_custom_call.1} parent=11 // pred_fallthru
          _
        // Predicated region
        $region53: #{tpu_custom_call.1} parent=11 // pred_check
          %p439 = pneg %p287
        $region54: #{tpu_custom_call.1} parent=11 // pred_check_branch
          %441 = sbr.rel (%p439) target = $region56
        $region55: #{tpu_custom_call.1} parent=11 // pred_region
          %s443 = ssub.s32 256, 256
          %444 = vsyncadd [#allocation9], %s443
          %s445 = sshll.u32 [#allocation10], 4
          %s446 = int_to_ptr.vmem [resolvable:$true] %s445
          %451 = dma.hbm_to_vmem [thread:$0]  %s11, 256, %s446, [#allocation9], 64, 64, 4
        $region56: #{tpu_custom_call.1} parent=11 // pred_fallthru
          _
        // Predicated region
        $region57: #{tpu_custom_call.1} parent=11 // pred_check
          %p452 = pneg %p308
        $region58: #{tpu_custom_call.1} parent=11 // pred_check_branch
          %454 = sbr.rel (%p452) target = $region60
        $region59: #{tpu_custom_call.1} parent=11 // pred_region
          _
        $region60: #{tpu_custom_call.1} parent=11 // pred_fallthru
          _
      $region12: #{tpu_custom_call.1} parent=5 // pred_fallthru
        _
      %p455 = scmp.lt.s32.totalorder %s30, 4
      // Predicated region
      $region61: #{tpu_custom_call.1} parent=5 // pred_check
        %p456 = pneg %p455
      $region62: #{tpu_custom_call.1} parent=5 // pred_check_branch
        %458 = sbr.rel (%p456) target = $region64
      $region63: #{tpu_custom_call.1} parent=5 // pred_region
        // Predicated region
        $region65: #{tpu_custom_call.1} parent=63 // pred_check
          %p459 = pneg %p50
        $region66: #{tpu_custom_call.1} parent=63 // pred_check_branch
          %461 = sbr.rel (%p459) target = $region68
        $region67: #{tpu_custom_call.1} parent=63 // pred_region
          %s462 = smul.u32 2, %s30
          %p463 = scmp.lt.s32.totalorder %s462, 7
          %s464 = scalar_select %p463, %s462, 7
          %s465 = smul.addr %s464, 8
          %s466 = scalar_lea.vmem %s0, %s465
          %s467 = smul.u32 2, %s30
        $region68: #{tpu_custom_call.1} parent=63 // pred_fallthru
          _
      $region64: #{tpu_custom_call.1} parent=5 // pred_fallthru
        _
      %p468 = scmp.le.s32.totalorder 1, %s30
      %p469 = scmp.lt.s32.totalorder %s30, 5
      %p470 = pnand %p468, %p469
      %p471 = pneg %p470
      // Predicated region
      $region69: #{tpu_custom_call.1} parent=5 // pred_check
        _
      $region70: #{tpu_custom_call.1} parent=5 // pred_check_branch
        %473 = sbr.rel (%p470) target = $region72
      $region71: #{tpu_custom_call.1} parent=5 // pred_region
        %s474 = ssub.s32 %s30, 1
        // Predicated region
        $region73: #{tpu_custom_call.1} parent=71 // pred_check
          %p475 = pneg %p119
        $region74: #{tpu_custom_call.1} parent=71 // pred_check_branch
          %477 = sbr.rel (%p475) target = $region76
        $region75: #{tpu_custom_call.1} parent=71 // pred_region
          %478 = dma.done [#allocation3], 1024
        $region76: #{tpu_custom_call.1} parent=71 // pred_fallthru
          _
        // Predicated region
        $region77: #{tpu_custom_call.1} parent=71 // pred_check
          %p479 = pneg %p161
        $region78: #{tpu_custom_call.1} parent=71 // pred_check_branch
          %481 = sbr.rel (%p479) target = $region80
        $region79: #{tpu_custom_call.1} parent=71 // pred_region
          %482 = dma.done [#allocation6], 16
        $region80: #{tpu_custom_call.1} parent=71 // pred_fallthru
          _
        // Predicated region
        $region81: #{tpu_custom_call.1} parent=71 // pred_check
          %p483 = pneg %p182
        $region82: #{tpu_custom_call.1} parent=71 // pred_check_branch
          %485 = sbr.rel (%p483) target = $region84
        $region83: #{tpu_custom_call.1} parent=71 // pred_region
          %486 = dma.done [#allocation6], 16
        $region84: #{tpu_custom_call.1} parent=71 // pred_fallthru
          _
        // Predicated region
        $region85: #{tpu_custom_call.1} parent=71 // pred_check
          %p487 = pneg %p224
        $region86: #{tpu_custom_call.1} parent=71 // pred_check_branch
          %489 = sbr.rel (%p487) target = $region88
        $region87: #{tpu_custom_call.1} parent=71 // pred_region
          %490 = dma.done [#allocation9], 16
        $region88: #{tpu_custom_call.1} parent=71 // pred_fallthru
          _
        // Predicated region
        $region89: #{tpu_custom_call.1} parent=71 // pred_check
          %p491 = pneg %p287
        $region90: #{tpu_custom_call.1} parent=71 // pred_check_branch
          %493 = sbr.rel (%p491) target = $region92
        $region91: #{tpu_custom_call.1} parent=71 // pred_region
          %494 = dma.done [#allocation9], 256
        $region92: #{tpu_custom_call.1} parent=71 // pred_fallthru
          _
        %s495 = smul.u32 2, %s35
        %p496 = scmp.lt.s32.totalorder %s495, 7
        %s497 = scalar_select %p496, %s495, 7
        %s498 = smul.addr %s497, 8
        %s499 = scalar_lea.vmem %s0, %s498
        %p500 = pneg %p56
        %p501 = pneg %p53
        %p502 = pneg %p77
        %p503 = pneg %p74
        %p504 = pneg %p98
        %p505 = pneg %p95
        %p506 = pneg %p119
        %p507 = pneg %p116
        %p508 = pneg %p140
        %p509 = pneg %p137
        %p510 = pneg %p161
        %p511 = pneg %p158
        %p512 = pneg %p182
        %p513 = pneg %p179
        %p514 = pneg %p203
        %p515 = pneg %p200
        %p516 = pneg %p224
        %p517 = pneg %p221
        %p518 = pneg %p245
        %p519 = pneg %p242
        %p520 = pneg %p266
        %p521 = pneg %p263
        %p522 = pneg %p287
        %p523 = pneg %p284
        %p524 = pneg %p308
        %p525 = pneg %p305
        %p526 = pneg %p334
        %p527 = pneg %p331
        %s528 = sand.u32 %s321, 1
        %s529 = scalar_lea.sflag [#allocation4], %s528
        %s530 = sand.u32 %s321, 1
        %s531 = smul.addr %s530, 16
        %s532 = scalar_lea.vmem [#allocation11], %s531
        %p533 = pneg %p360
        %p534 = pneg %p357
        %s535 = sand.u32 %s347, 1
        %s536 = scalar_lea.sflag [#allocation13], %s535
        %s537 = sand.u32 %s347, 1
        %s538 = smul.addr %s537, 8
        %s539 = scalar_lea.vmem [#allocation12], %s538
        %s540 = smul.u32 2, %s35
        %p541 = scmp.lt.s32.totalorder %s540, 7
        %s542 = scalar_select %p541, %s540, 7
        %s543 = smul.addr %s542, 8
        %s544 = scalar_lea.vmem %s0, %s543
        %s545 = smul.u32 2, %s35
        %s546 = smul.u32 2, %s35
        %s547 = smul.u32 2, %s35
        %v549 = vld [vmem:[%s544] sm:$0xff]
        %v550 = vld [vmem:[%s544 + $0x8] sm:$0xff]
        %v551 = vpack.c.bf16 %v550, %v549
        %v552 = vld [vmem:[%s1] sm:$0xf]
        %v553 = vld [vmem:[%s1 + $0x4] sm:$0xf]
        %v554 = vld [vmem:[%s1 + $0x8] sm:$0xf]
        %v555 = vld [vmem:[%s1 + $0xc] sm:$0xf]
        %v556 = vld [vmem:[%s1 + $0x10] sm:$0xf]
        %v557 = vld [vmem:[%s1 + $0x14] sm:$0xf]
        %v558 = vld [vmem:[%s1 + $0x18] sm:$0xf]
        %v559 = vld [vmem:[%s1 + $0x1c] sm:$0xf]
        %v560 = vld [vmem:[%s1 + $0x20] sm:$0xf]
        %v561 = vld [vmem:[%s1 + $0x24] sm:$0xf]
        %v562 = vld [vmem:[%s1 + $0x28] sm:$0xf]
        %v563 = vld [vmem:[%s1 + $0x2c] sm:$0xf]
        %v564 = vld [vmem:[%s1 + $0x30] sm:$0xf]
        %v565 = vld [vmem:[%s1 + $0x34] sm:$0xf]
        %v566 = vld [vmem:[%s1 + $0x38] sm:$0xf]
        %v567 = vld [vmem:[%s1 + $0x3c] sm:$0xf]
        %v568 = vld [vmem:[%s2] sm:$0x1]
        %v570 = vlaneseq
        %v571 = vshrl.u32 %v570, 7
        %v572 = vsub.s32 0, %v571
        %v573 = vrot.slane %v568, %v572
        %v591 = vunpack.c.l.b16 %v552
        %v592 = vunpack.c.l.b16 %v553
        %v593 = vunpack.c.l.b16 %v554
        %v594 = vunpack.c.l.b16 %v555
        %v595 = vunpack.c.l.b16 %v556
        %v596 = vunpack.c.l.b16 %v557
        %v597 = vunpack.c.l.b16 %v558
        %v598 = vunpack.c.l.b16 %v559
        %v599 = vunpack.c.l.b16 %v560
        %v600 = vunpack.c.l.b16 %v561
        %v601 = vunpack.c.l.b16 %v562
        %v602 = vunpack.c.l.b16 %v563
        %v603 = vunpack.c.l.b16 %v564
        %v604 = vunpack.c.l.b16 %v565
        %v605 = vunpack.c.l.b16 %v566
        %v606 = vunpack.c.l.b16 %v567
        %v607 = vpack.c.b16 %v592, %v591
        %v608 = vpack.c.b16 %v594, %v593
        %v609 = vpack.c.b16 %v596, %v595
        %v610 = vpack.c.b16 %v598, %v597
        %v611 = vpack.c.b16 %v600, %v599
        %v612 = vpack.c.b16 %v602, %v601
        %v613 = vpack.c.b16 %v604, %v603
        %v614 = vpack.c.b16 %v606, %v605
        %623 = vmatprep.subr.bf16.mxu0 0
        %624 = vmatpush1.bf16.msra.mxu0 %v607
        %625 = vmatprep.subr.bf16.mxu0 0
        %626 = vmatpush1.bf16.msra.mxu0 %v608
        %627 = vmatprep.subr.bf16.mxu0 0
        %628 = vmatpush1.bf16.msra.mxu0 %v609
        %629 = vmatprep.subr.bf16.mxu0 0
        %630 = vmatpush1.bf16.msra.mxu0 %v610
        %631 = vmatprep.subr.bf16.mxu0 0
        %632 = vmatpush1.bf16.msra.mxu0 %v611
        %633 = vmatprep.subr.bf16.mxu0 0
        %634 = vmatpush1.bf16.msra.mxu0 %v612
        %635 = vmatprep.subr.bf16.mxu0 0
        %636 = vmatpush1.bf16.msra.mxu0 %v613
        %637 = vmatprep.subr.bf16.mxu0 0
        %638 = vmatpush1.bf16.msra.mxu0 %v614
        %639 = vmatprep.subr.bf16.mxu0 0
        %640 = vmatpush1.bf16.msra.mxu0 0
        %641 = vmatprep.subr.bf16.mxu0 0
        %642 = vmatpush1.bf16.msra.mxu0 0
        %643 = vmatprep.subr.bf16.mxu0 0
        %644 = vmatpush1.bf16.msra.mxu0 0
        %645 = vmatprep.subr.bf16.mxu0 0
        %646 = vmatpush1.bf16.msra.mxu0 0
        %647 = vmatprep.subr.bf16.mxu0 0
        %648 = vmatpush1.bf16.msra.mxu0 0
        %649 = vmatprep.subr.bf16.mxu0 0
        %650 = vmatpush1.bf16.msra.mxu0 0
        %651 = vmatprep.subr.bf16.mxu0 0
        %652 = vmatpush1.bf16.msra.mxu0 0
        %653 = vmatprep.subr.bf16.mxu0 0
        %654 = vmatpush1.bf16.msra.mxu0 0
        %655 = vmatprep.mubr.bf16.mxu0 0
        %656 = vmatmul.mubr.bf16.gmra.mrb[0].mxu0 %v551
        %v657 = vpop.f32.mrb[0].mxu0
        %v658 = vadd.f32 %v573, %v657
        %v659 = vpop.f32.mrb[0].mxu0
        %v660 = vpop.f32.mrb[0].mxu0
        %v661 = vadd.f32 %v573, %v660
        %v662 = vpop.f32.mrb[0].mxu0
        %663 = vdwg.mxu0
        %v664 = vmul.f32 %v658, 0.01
        %v665 = vmul.f32 %v661, 0.01
        %v666 = vmax.f32 %v658, %v664
        %v667 = vmax.f32 %v661, %v665
        %v668 = vpack.c.bf16 %v667, %v666
        %v669 = vld [vmem:[#allocation2] sm:$0xf]
        %v670 = vld [vmem:[#allocation2 + $0x4] sm:$0xf]
        %v671 = vld [vmem:[#allocation2 + $0x8] sm:$0xf]
        %v672 = vld [vmem:[#allocation2 + $0xc] sm:$0xf]
        %v673 = vld [vmem:[#allocation2 + $0x10] sm:$0xf]
        %v674 = vld [vmem:[#allocation2 + $0x14] sm:$0xf]
        %v675 = vld [vmem:[#allocation2 + $0x18] sm:$0xf]
        %v676 = vld [vmem:[#allocation2 + $0x1c] sm:$0xf]
        %v677 = vld [vmem:[#allocation2 + $0x20] sm:$0xf]
        %v678 = vld [vmem:[#allocation2 + $0x24] sm:$0xf]
        %v679 = vld [vmem:[#allocation2 + $0x28] sm:$0xf]
        %v680 = vld [vmem:[#allocation2 + $0x2c] sm:$0xf]
        %v681 = vld [vmem:[#allocation2 + $0x30] sm:$0xf]
        %v682 = vld [vmem:[#allocation2 + $0x34] sm:$0xf]
        %v683 = vld [vmem:[#allocation2 + $0x38] sm:$0xf]
        %v684 = vld [vmem:[#allocation2 + $0x3c] sm:$0xf]
        %v685 = vld [vmem:[%s4] sm:$0x1]
        %v687 = vlaneseq
        %v688 = vshrl.u32 %v687, 7
        %v689 = vsub.s32 0, %v688
        %v690 = vrot.slane %v685, %v689
        %v708 = vunpack.c.l.b16 %v669
        %v709 = vunpack.c.l.b16 %v670
        %v710 = vunpack.c.l.b16 %v671
        %v711 = vunpack.c.l.b16 %v672
        %v712 = vunpack.c.l.b16 %v673
        %v713 = vunpack.c.l.b16 %v674
        %v714 = vunpack.c.l.b16 %v675
        %v715 = vunpack.c.l.b16 %v676
        %v716 = vunpack.c.l.b16 %v677
        %v717 = vunpack.c.l.b16 %v678
        %v718 = vunpack.c.l.b16 %v679
        %v719 = vunpack.c.l.b16 %v680
        %v720 = vunpack.c.l.b16 %v681
        %v721 = vunpack.c.l.b16 %v682
        %v722 = vunpack.c.l.b16 %v683
        %v723 = vunpack.c.l.b16 %v684
        %v724 = vpack.c.b16 %v709, %v708
        %v725 = vpack.c.b16 %v711, %v710
        %v726 = vpack.c.b16 %v713, %v712
        %v727 = vpack.c.b16 %v715, %v714
        %v728 = vpack.c.b16 %v717, %v716
        %v729 = vpack.c.b16 %v719, %v718
        %v730 = vpack.c.b16 %v721, %v720
        %v731 = vpack.c.b16 %v723, %v722
        %740 = vmatprep.subr.bf16.mxu0 0
        %741 = vmatpush1.bf16.msra.mxu0 %v724
        %742 = vmatprep.subr.bf16.mxu0 0
        %743 = vmatpush1.bf16.msra.mxu0 %v725
        %744 = vmatprep.subr.bf16.mxu0 0
        %745 = vmatpush1.bf16.msra.mxu0 %v726
        %746 = vmatprep.subr.bf16.mxu0 0
        %747 = vmatpush1.bf16.msra.mxu0 %v727
        %748 = vmatprep.subr.bf16.mxu0 0
        %749 = vmatpush1.bf16.msra.mxu0 %v728
        %750 = vmatprep.subr.bf16.mxu0 0
        %751 = vmatpush1.bf16.msra.mxu0 %v729
        %752 = vmatprep.subr.bf16.mxu0 0
        %753 = vmatpush1.bf16.msra.mxu0 %v730
        %754 = vmatprep.subr.bf16.mxu0 0
        %755 = vmatpush1.bf16.msra.mxu0 %v731
        %756 = vmatprep.subr.bf16.mxu0 0
        %757 = vmatpush1.bf16.msra.mxu0 0
        %758 = vmatprep.subr.bf16.mxu0 0
        %759 = vmatpush1.bf16.msra.mxu0 0
        %760 = vmatprep.subr.bf16.mxu0 0
        %761 = vmatpush1.bf16.msra.mxu0 0
        %762 = vmatprep.subr.bf16.mxu0 0
        %763 = vmatpush1.bf16.msra.mxu0 0
        %764 = vmatprep.subr.bf16.mxu0 0
        %765 = vmatpush1.bf16.msra.mxu0 0
        %766 = vmatprep.subr.bf16.mxu0 0
        %767 = vmatpush1.bf16.msra.mxu0 0
        %768 = vmatprep.subr.bf16.mxu0 0
        %769 = vmatpush1.bf16.msra.mxu0 0
        %770 = vmatprep.subr.bf16.mxu0 0
        %771 = vmatpush1.bf16.msra.mxu0 0
        %772 = vmatprep.mubr.bf16.mxu0 0
        %773 = vmatmul.mubr.bf16.gmra.mrb[0].mxu0 %v668
        %v774 = vpop.f32.mrb[0].mxu0
        %v775 = vadd.f32 %v690, %v774
        %v776 = vpop.f32.mrb[0].mxu0
        %v777 = vpop.f32.mrb[0].mxu0
        %v778 = vadd.f32 %v690, %v777
        %v779 = vpop.f32.mrb[0].mxu0
        %780 = vdwg.mxu0
        %v781 = vpack.c.bf16 %v778, %v775
        %v783 = vunpack.c.l.b16 %v781
        %v784 = vunpack.c.h.b16 %v781
        %v785 = vpack.c.b16 %v783, %v783
        %v786 = vpack.c.b16 %v784, %v784
        %789 = vst [vmem:[%s539] sm:$0xf] %v785
        %790 = vst [vmem:[%s539 + $0x4] sm:$0xf] %v786
        %v791 = vld [vmem:[#allocation5] sm:$0x1]
        %v793 = vlaneseq
        %v794 = vshrl.u32 %v793, 7
        %v795 = vsub.s32 0, %v794
        %v796 = vrot.slane %v791, %v795
        %v798 = vmul.f32 %v775, %v796
        %v799 = vmul.f32 %v778, %v796
        %v800 = vld [vmem:[#allocation7] sm:$0x1]
        %v802 = vlaneseq
        %v803 = vshrl.u32 %v802, 7
        %v804 = vsub.s32 0, %v803
        %v805 = vrot.slane %v800, %v804
        %v807 = vadd.f32 %v798, %v805
        %v808 = vadd.f32 %v799, %v805
        %v809 = vmax.f32 %v807, 0.0
        %v810 = vmax.f32 %v808, 0.0
        %v811 = vpack.c.bf16 %v810, %v809
        %v812 = vld [vmem:[%s7] sm:$0xf]
        %v813 = vld [vmem:[%s7 + $0x4] sm:$0xf]
        %v814 = vld [vmem:[%s7 + $0x8] sm:$0xf]
        %v815 = vld [vmem:[%s7 + $0xc] sm:$0xf]
        %v816 = vld [vmem:[%s7 + $0x10] sm:$0xf]
        %v817 = vld [vmem:[%s7 + $0x14] sm:$0xf]
        %v818 = vld [vmem:[%s7 + $0x18] sm:$0xf]
        %v819 = vld [vmem:[%s7 + $0x1c] sm:$0xf]
        %v820 = vld [vmem:[%s7 + $0x20] sm:$0xf]
        %v821 = vld [vmem:[%s7 + $0x24] sm:$0xf]
        %v822 = vld [vmem:[%s7 + $0x28] sm:$0xf]
        %v823 = vld [vmem:[%s7 + $0x2c] sm:$0xf]
        %v824 = vld [vmem:[%s7 + $0x30] sm:$0xf]
        %v825 = vld [vmem:[%s7 + $0x34] sm:$0xf]
        %v826 = vld [vmem:[%s7 + $0x38] sm:$0xf]
        %v827 = vld [vmem:[%s7 + $0x3c] sm:$0xf]
        %v828 = vld [vmem:[#allocation8] sm:$0x1]
        %v830 = vlaneseq
        %v831 = vshrl.u32 %v830, 7
        %v832 = vsub.s32 0, %v831
        %v833 = vrot.slane %v828, %v832
        %v851 = vunpack.c.l.b16 %v812
        %v852 = vunpack.c.l.b16 %v813
        %v853 = vunpack.c.l.b16 %v814
        %v854 = vunpack.c.l.b16 %v815
        %v855 = vunpack.c.l.b16 %v816
        %v856 = vunpack.c.l.b16 %v817
        %v857 = vunpack.c.l.b16 %v818
        %v858 = vunpack.c.l.b16 %v819
        %v859 = vunpack.c.l.b16 %v820
        %v860 = vunpack.c.l.b16 %v821
        %v861 = vunpack.c.l.b16 %v822
        %v862 = vunpack.c.l.b16 %v823
        %v863 = vunpack.c.l.b16 %v824
        %v864 = vunpack.c.l.b16 %v825
        %v865 = vunpack.c.l.b16 %v826
        %v866 = vunpack.c.l.b16 %v827
        %v867 = vpack.c.b16 %v852, %v851
        %v868 = vpack.c.b16 %v854, %v853
        %v869 = vpack.c.b16 %v856, %v855
        %v870 = vpack.c.b16 %v858, %v857
        %v871 = vpack.c.b16 %v860, %v859
        %v872 = vpack.c.b16 %v862, %v861
        %v873 = vpack.c.b16 %v864, %v863
        %v874 = vpack.c.b16 %v866, %v865
        %883 = vmatprep.subr.bf16.mxu0 0
        %884 = vmatpush1.bf16.msra.mxu0 %v867
        %885 = vmatprep.subr.bf16.mxu0 0
        %886 = vmatpush1.bf16.msra.mxu0 %v868
        %887 = vmatprep.subr.bf16.mxu0 0
        %888 = vmatpush1.bf16.msra.mxu0 %v869
        %889 = vmatprep.subr.bf16.mxu0 0
        %890 = vmatpush1.bf16.msra.mxu0 %v870
        %891 = vmatprep.subr.bf16.mxu0 0
        %892 = vmatpush1.bf16.msra.mxu0 %v871
        %893 = vmatprep.subr.bf16.mxu0 0
        %894 = vmatpush1.bf16.msra.mxu0 %v872
        %895 = vmatprep.subr.bf16.mxu0 0
        %896 = vmatpush1.bf16.msra.mxu0 %v873
        %897 = vmatprep.subr.bf16.mxu0 0
        %898 = vmatpush1.bf16.msra.mxu0 %v874
        %899 = vmatprep.subr.bf16.mxu0 0
        %900 = vmatpush1.bf16.msra.mxu0 0
        %901 = vmatprep.subr.bf16.mxu0 0
        %902 = vmatpush1.bf16.msra.mxu0 0
        %903 = vmatprep.subr.bf16.mxu0 0
        %904 = vmatpush1.bf16.msra.mxu0 0
        %905 = vmatprep.subr.bf16.mxu0 0
        %906 = vmatpush1.bf16.msra.mxu0 0
        %907 = vmatprep.subr.bf16.mxu0 0
        %908 = vmatpush1.bf16.msra.mxu0 0
        %909 = vmatprep.subr.bf16.mxu0 0
        %910 = vmatpush1.bf16.msra.mxu0 0
        %911 = vmatprep.subr.bf16.mxu0 0
        %912 = vmatpush1.bf16.msra.mxu0 0
        %913 = vmatprep.subr.bf16.mxu0 0
        %914 = vmatpush1.bf16.msra.mxu0 0
        %915 = vmatprep.mubr.bf16.mxu0 0
        %916 = vmatmul.mubr.bf16.gmra.mrb[0].mxu0 %v811
        %v917 = vpop.f32.mrb[0].mxu0
        %v918 = vadd.f32 %v833, %v917
        %v919 = vpop.f32.mrb[0].mxu0
        %v920 = vpop.f32.mrb[0].mxu0
        %v921 = vadd.f32 %v833, %v920
        %v922 = vpop.f32.mrb[0].mxu0
        %923 = vdwg.mxu0
        %v924 = vmax.f32 %v918, 0.0
        %v925 = vmax.f32 %v921, 0.0
        %v926 = vpack.c.bf16 %v925, %v924
        %v927 = vld [vmem:[%s9] sm:$0xf]
        %v928 = vld [vmem:[%s9 + $0x4] sm:$0xf]
        %v929 = vld [vmem:[%s9 + $0x8] sm:$0xf]
        %v930 = vld [vmem:[%s9 + $0xc] sm:$0xf]
        %v931 = vld [vmem:[%s9 + $0x10] sm:$0xf]
        %v932 = vld [vmem:[%s9 + $0x14] sm:$0xf]
        %v933 = vld [vmem:[%s9 + $0x18] sm:$0xf]
        %v934 = vld [vmem:[%s9 + $0x1c] sm:$0xf]
        %v935 = vld [vmem:[%s10] sm:$0x1]
        %v937 = vlaneseq
        %v938 = vshrl.u32 %v937, 7
        %v939 = vsub.s32 0, %v938
        %v940 = vrot.slane %v935, %v939
        %v950 = vunpack.c.l.b16 %v927
        %v951 = vunpack.c.l.b16 %v928
        %v952 = vunpack.c.l.b16 %v929
        %v953 = vunpack.c.l.b16 %v930
        %v954 = vunpack.c.l.b16 %v931
        %v955 = vunpack.c.l.b16 %v932
        %v956 = vunpack.c.l.b16 %v933
        %v957 = vunpack.c.l.b16 %v934
        %v958 = vpack.c.b16 %v951, %v950
        %v959 = vpack.c.b16 %v953, %v952
        %v960 = vpack.c.b16 %v955, %v954
        %v961 = vpack.c.b16 %v957, %v956
        %vm966 = vcmask 523264
        %v968 = vsel %vm966, %v926, 0
        %970 = vmatprep.subr.bf16.mxu0 0
        %971 = vmatpush1.bf16.msra.mxu0 %v958
        %972 = vmatprep.subr.bf16.mxu0 0
        %973 = vmatpush1.bf16.msra.mxu0 %v959
        %974 = vmatprep.subr.bf16.mxu0 0
        %975 = vmatpush1.bf16.msra.mxu0 %v960
        %976 = vmatprep.subr.bf16.mxu0 0
        %977 = vmatpush1.bf16.msra.mxu0 %v961
        %978 = vmatprep.subr.bf16.mxu0 0
        %979 = vmatpush1.bf16.msra.mxu0 0
        %980 = vmatprep.subr.bf16.mxu0 0
        %981 = vmatpush1.bf16.msra.mxu0 0
        %982 = vmatprep.subr.bf16.mxu0 0
        %983 = vmatpush1.bf16.msra.mxu0 0
        %984 = vmatprep.subr.bf16.mxu0 0
        %985 = vmatpush1.bf16.msra.mxu0 0
        %986 = vmatprep.subr.bf16.mxu0 0
        %987 = vmatpush1.bf16.msra.mxu0 0
        %988 = vmatprep.subr.bf16.mxu0 0
        %989 = vmatpush1.bf16.msra.mxu0 0
        %990 = vmatprep.subr.bf16.mxu0 0
        %991 = vmatpush1.bf16.msra.mxu0 0
        %992 = vmatprep.subr.bf16.mxu0 0
        %993 = vmatpush1.bf16.msra.mxu0 0
        %994 = vmatprep.subr.bf16.mxu0 0
        %995 = vmatpush1.bf16.msra.mxu0 0
        %996 = vmatprep.subr.bf16.mxu0 0
        %997 = vmatpush1.bf16.msra.mxu0 0
        %998 = vmatprep.subr.bf16.mxu0 0
        %999 = vmatpush1.bf16.msra.mxu0 0
        %1000 = vmatprep.subr.bf16.mxu0 0
        %1001 = vmatpush1.bf16.msra.mxu0 0
        %1002 = vmatprep.mubr.bf16.mxu0 0
        %1003 = vmatmul.mubr.bf16.gmra.mrb[0].mxu0 %v968
        %v1004 = vpop.f32.mrb[0].mxu0
        %v1005 = vadd.f32 %v940, %v1004
        %v1006 = vpop.f32.mrb[0].mxu0
        %v1007 = vpop.f32.mrb[0].mxu0
        %v1008 = vadd.f32 %v940, %v1007
        %v1009 = vpop.f32.mrb[0].mxu0
        %1010 = vdwg.mxu0
        %v1011 = vmax.f32 %v1005, 0.0
        %v1012 = vmax.f32 %v1008, 0.0
        %v1013 = vpack.c.bf16 %v1012, %v1011
        %v1014 = vld [vmem:[#allocation10] sm:$0xf]
        %v1015 = vld [vmem:[#allocation10 + $0x4] sm:$0xf]
        %v1016 = vld [vmem:[#allocation10 + $0x8] sm:$0xf]
        %v1017 = vld [vmem:[#allocation10 + $0xc] sm:$0xf]
        %v1018 = vld [vmem:[%s12] sm:$0x1]
        %v1020 = vlaneseq
        %v1021 = vshrl.u32 %v1020, 7
        %v1022 = vsub.s32 0, %v1021
        %v1023 = vrot.slane %v1018, %v1022
        %v1029 = vunpack.c.l.b16 %v1014
        %v1030 = vunpack.c.l.b16 %v1015
        %v1031 = vunpack.c.l.b16 %v1016
        %v1032 = vunpack.c.l.b16 %v1017
        %v1033 = vpack.c.b16 %v1030, %v1029
        %v1034 = vpack.c.b16 %v1032, %v1031
        %vm1037 = vcmask 261120
        %v1039 = vsel %vm1037, %v1013, 0
        %1041 = vmatprep.subr.bf16.mxu0 0
        %1042 = vmatpush1.bf16.msra.mxu0 %v1033
        %1043 = vmatprep.subr.bf16.mxu0 0
        %1044 = vmatpush1.bf16.msra.mxu0 %v1034
        %1045 = vmatprep.subr.bf16.mxu0 0
        %1046 = vmatpush1.bf16.msra.mxu0 0
        %1047 = vmatprep.subr.bf16.mxu0 0
        %1048 = vmatpush1.bf16.msra.mxu0 0
        %1049 = vmatprep.subr.bf16.mxu0 0
        %1050 = vmatpush1.bf16.msra.mxu0 0
        %1051 = vmatprep.subr.bf16.mxu0 0
        %1052 = vmatpush1.bf16.msra.mxu0 0
        %1053 = vmatprep.subr.bf16.mxu0 0
        %1054 = vmatpush1.bf16.msra.mxu0 0
        %1055 = vmatprep.subr.bf16.mxu0 0
        %1056 = vmatpush1.bf16.msra.mxu0 0
        %1057 = vmatprep.subr.bf16.mxu0 0
        %1058 = vmatpush1.bf16.msra.mxu0 0
        %1059 = vmatprep.subr.bf16.mxu0 0
        %1060 = vmatpush1.bf16.msra.mxu0 0
        %1061 = vmatprep.subr.bf16.mxu0 0
        %1062 = vmatpush1.bf16.msra.mxu0 0
        %1063 = vmatprep.subr.bf16.mxu0 0
        %1064 = vmatpush1.bf16.msra.mxu0 0
        %1065 = vmatprep.subr.bf16.mxu0 0
        %1066 = vmatpush1.bf16.msra.mxu0 0
        %1067 = vmatprep.subr.bf16.mxu0 0
        %1068 = vmatpush1.bf16.msra.mxu0 0
        %1069 = vmatprep.subr.bf16.mxu0 0
        %1070 = vmatpush1.bf16.msra.mxu0 0
        %1071 = vmatprep.subr.bf16.mxu0 0
        %1072 = vmatpush1.bf16.msra.mxu0 0
        %1073 = vmatprep.mubr.bf16.mxu0 0
        %1074 = vmatmul.mubr.bf16.gmra.mrb[0].mxu0 %v1039
        %v1075 = vpop.f32.mrb[0].mxu0
        %v1076 = vadd.f32 %v1023, %v1075
        %v1077 = vpop.f32.mrb[0].mxu0
        %v1078 = vpop.f32.mrb[0].mxu0
        %v1079 = vadd.f32 %v1023, %v1078
        %v1080 = vpop.f32.mrb[0].mxu0
        %1081 = vdwg.mxu0
        %1082 = vst [vmem:[%s532] sm:$0xff] %v1076
        %1083 = vst [vmem:[%s532 + $0x8] sm:$0xff] %v1079
        %s1084 = sand.u32 %s321, 1
        %s1085 = scalar_lea.sflag [#allocation4], %s1084
        %s1086 = sand.u32 %s321, 1
        %s1087 = smul.addr %s1086, 16
        %s1088 = scalar_lea.vmem [#allocation11], %s1087
        %s1089 = sand.u32 %s347, 1
        %s1090 = scalar_lea.sflag [#allocation13], %s1089
        %s1091 = sand.u32 %s347, 1
        %s1092 = smul.addr %s1091, 8
        %s1093 = scalar_lea.vmem [#allocation12], %s1092
        // Predicated region
        $region93: #{tpu_custom_call.1} parent=71 // pred_check
          %p1094 = pneg %p331
        $region94: #{tpu_custom_call.1} parent=71 // pred_check_branch
          %1096 = sbr.rel (%p1094) target = $region96
        $region95: #{tpu_custom_call.1} parent=71 // pred_region
          %s1097 = smul.u32 2, %s35
          %s1099 = ssub.s32 256, 256
          %1100 = vsyncadd %s1085, %s1099
          %s1101 = smul.addr %s1097, 128
          %s1102 = scalar_lea.hbm %s13, %s1101
          %s1103 = sshll.u32 %s1088, 4
          %s1104 = int_to_ptr.vmem [resolvable:$true] %s1103
          %1109 = dma.vmem_to_hbm [thread:$0]  %s1104, 256, %s1102, %s1085, 128, 128, 8
        $region96: #{tpu_custom_call.1} parent=71 // pred_fallthru
          _
        // Predicated region
        $region97: #{tpu_custom_call.1} parent=71 // pred_check
          %p1110 = pneg %p357
        $region98: #{tpu_custom_call.1} parent=71 // pred_check_branch
          %1112 = sbr.rel (%p1110) target = $region100
        $region99: #{tpu_custom_call.1} parent=71 // pred_region
          %s1113 = smul.u32 2, %s35
          %s1115 = ssub.s32 128, 128
          %1116 = vsyncadd %s1090, %s1115
          %s1117 = smul.addr %s1113, 64
          %s1118 = scalar_lea.hbm %s14, %s1117
          %s1119 = sshll.u32 %s1093, 4
          %s1120 = int_to_ptr.vmem [resolvable:$true] %s1119
          %1125 = dma.vmem_to_hbm [thread:$0]  %s1120, 128, %s1118, %s1090, 64, 64, 4
        $region100: #{tpu_custom_call.1} parent=71 // pred_fallthru
          _
      $region72: #{tpu_custom_call.1} parent=5 // pred_fallthru
        _
      %p1126 = scmp.le.s32.totalorder 2, %s30
      // Predicated region
      $region101: #{tpu_custom_call.1} parent=5 // pred_check
        %p1127 = pneg %p1126
      $region102: #{tpu_custom_call.1} parent=5 // pred_check_branch
        %1129 = sbr.rel (%p1127) target = $region104
      $region103: #{tpu_custom_call.1} parent=5 // pred_region
        %s1130 = ssub.s32 %s30, 2
        // Predicated region
        $region105: #{tpu_custom_call.1} parent=103 // pred_check
          %p1131 = pneg %p337
        $region106: #{tpu_custom_call.1} parent=103 // pred_check_branch
          %1133 = sbr.rel (%p1131) target = $region108
        $region107: #{tpu_custom_call.1} parent=103 // pred_region
          %s1134 = sand.u32 %s322, 1
          %s1135 = scalar_lea.sflag [#allocation4], %s1134
          %s1136 = sand.u32 %s322, 1
          %s1137 = smul.addr %s1136, 16
          %s1138 = scalar_lea.vmem [#allocation11], %s1137
          %1139 = dma.done %s1135, 256
        $region108: #{tpu_custom_call.1} parent=103 // pred_fallthru
          _
        // Predicated region
        $region109: #{tpu_custom_call.1} parent=103 // pred_check
          %p1140 = pneg %p363
        $region110: #{tpu_custom_call.1} parent=103 // pred_check_branch
          %1142 = sbr.rel (%p1140) target = $region112
        $region111: #{tpu_custom_call.1} parent=103 // pred_region
          %s1143 = sand.u32 %s348, 1
          %s1144 = scalar_lea.sflag [#allocation13], %s1143
          %s1145 = sand.u32 %s348, 1
          %s1146 = smul.addr %s1145, 8
          %s1147 = scalar_lea.vmem [#allocation12], %s1146
          %1148 = dma.done %s1144, 128
        $region112: #{tpu_custom_call.1} parent=103 // pred_fallthru
          _
      $region104: #{tpu_custom_call.1} parent=5 // pred_fallthru
        _
    $region6: #{tpu_custom_call.1} parent=1 // loop_footer
      %s34 = sadd.s32 1, %s30
    $region7: #{tpu_custom_call.1} parent=1 // loop_footer_branch
      %29 = sbr.rel target = $region3
    $region8: #{tpu_custom_call.1} parent=1 // loop_exit
      _
    %1149 = vsyncpa [#allocation3], 1
    %s1150 = scalar_lea.sflag [#allocation3], 1
    %1151 = vsyncpa %s1150, 1
    %1152 = vsyncpa [#allocation6], 1
    %1153 = vsyncpa [#allocation9], 1
    %1154 = vsyncpa [#allocation4], 1
    %s1155 = scalar_lea.sflag [#allocation4], 1
    %1156 = vsyncpa %s1155, 1
    %1157 = vsyncpa [#allocation13], 1
    %s1158 = scalar_lea.sflag [#allocation13], 1
    %1159 = vsyncpa %s1158, 1

</llo_original>
